<compile_context>
chip_gen: v7x
topology: tpu7x:2x2x1
jax: 0.10.0
libtpu: 0.0.40
codegen_flags: <defaults>
</compile_context>

<pallas_src>
import functools

import numpy as np
import jax
import jax.numpy as jnp
from jax import lax
from jax.experimental import pallas as pl
from jax.experimental.pallas import tpu as pltpu

EPS = 1e-5


def _round_up(n, m):
    return (n + m - 1) // m * m


@functools.lru_cache(maxsize=None)
def _board_masks(H, W):
    """(9, H*W) tap-validity masks for a zero-padded 3x3 depthwise conv.
    Tap order is row-major (dh, dw) in {-1,0,1}^2, matching the (kh, kw) layout
    of the PyTorch / lax cross-correlation kernel."""
    p = np.arange(H * W)
    h, w = p // W, p % W
    rows = []
    for dh in (-1, 0, 1):
        for dw in (-1, 0, 1):
            rows.append((h + dh >= 0) & (h + dh < H) & (w + dw >= 0) & (w + dw < W))
    return np.stack(rows).astype(np.float32)


def _pick_tile(P, HW):
    """Pixel-tile width: whole boards (so lane rolls never leak across a tile
    edge except at positions the masks already zero), lane-aligned (multiple of
    128), >= 512 when possible, and >= 2 tiles so the 'parallel' grid axis can
    use both v7x TensorCores.  Falls back to a single full-width block."""
    cands = [c for c in (512, 1024, 2048) if c % HW == 0 and P % c == 0]
    if not cands:
        return P
    multi = [c for c in cands if P // c >= 2]
    return max(multi) if multi else max(cands)


def _make_kernel(Cin, hidden, Cout, tile, W, r_exp, r_proj, use_res):
    shifts = tuple(dh * W + dw for dh in (-1, 0, 1) for dw in (-1, 0, 1))

    def kernel(x_ref, c_ref, o_ref):
        x = x_ref[...]                                     # (Cin, tile)

        # Static, row-aligned views into the single packed-constants operand.
        masks = c_ref[0:9, 0:tile]                         # (9, tile) tap validity
        ep = c_ref[r_exp:r_exp + hidden, 0:128]            # expand-stage params
        pp = c_ref[r_proj:r_proj + Cout, 0:128]            # project-stage params
        w1, b1 = ep[:, 0:Cin], ep[:, Cin:Cin + 1]
        wd, b2 = ep[:, Cin + 1:Cin + 10], ep[:, Cin + 10:Cin + 11]
        w3, b3 = pp[:, 0:hidden], pp[:, hidden:hidden + 1]

        # --- 1x1 expand conv (+ folded BN) + ReLU6 ---------------------- MXU
        h1 = jnp.dot(w1, x, preferred_element_type=jnp.float32)
        h1 = jnp.clip(h1 + b1, 0.0, 6.0)                   # (hidden, tile)

        # --- 3x3 depthwise conv (+ folded BN) + ReLU6 ------------ XLU + VPU
        # Tap (dh, dw): value at destination pixel p is h1[p + dh*W + dw] when
        # the shifted position stays on the board (zero padding otherwise).
        acc = b2                                           # (hidden, 1) -> broadcasts
        for k, s in enumerate(shifts):
            t = h1 if s == 0 else pltpu.roll(h1, (-s) % tile, axis=1)
            acc = acc + wd[:, k:k + 1] * (t * masks[k:k + 1, :])
        acc = jnp.clip(acc, 0.0, 6.0)                      # (hidden, tile)

        # --- 1x1 project conv (+ folded BN) (+ residual) ---------------- MXU
        out = jnp.dot(w3, acc, preferred_element_type=jnp.float32) + b3
        if use_res:
            out = out + x
        o_ref[...] = out                                   # lane-dense store

    return kernel


@functools.partial(jax.jit, static_argnames=("expansion", "stride"))
def mobile_inverted_bottleneck(x_nchw, p, *, expansion=4, stride=1):
    """x_nchw: (N, Cin, H, W) float32. Returns (N, Cout, H, W)."""
    # TODO(synk): stride=2 and the expansion==1 branch (which drops the expand
    # conv) of the PyTorch module are not implemented.
    assert stride == 1 and expansion != 1
    N, Cin, H, W = x_nchw.shape
    HW = H * W
    P = N * HW
    hidden = Cin * expansion
    Cout = p["w3"].shape[0]
    use_res = Cin == Cout
    assert Cin + 11 <= 128 and hidden + 1 <= 128, "packed-param lane budget"

    tile = _pick_tile(P, HW)
    Wc = max(tile, 128)
    r_exp = 16                                  # 9 mask rows padded to 16 (sublane-aligned)
    r_proj = r_exp + _round_up(hidden, 8)
    c_rows = r_proj + _round_up(Cout, 8)

    # ---- fold eval-mode BatchNorms into the convs (plain-JAX glue, under jit) ----
    s1 = p["g1"] / jnp.sqrt(p["v1"] + EPS)
    w1_f = p["w1"][:, :, 0, 0] * s1[:, None]                # (hidden, Cin)
    b1_f = p["be1"] - p["m1"] * s1                          # (hidden,)
    s2 = p["g2"] / jnp.sqrt(p["v2"] + EPS)
    wd_f = p["wd"][:, 0].reshape(hidden, 9) * s2[:, None]   # (hidden, 9)
    b2_f = p["be2"] - p["m2"] * s2                          # (hidden,)
    s3 = p["g3"] / jnp.sqrt(p["v3"] + EPS)
    w3_f = p["w3"][:, :, 0, 0] * s3[:, None]                # (Cout, hidden)
    b3_f = p["be3"] - p["m3"] * s3                          # (Cout,)

    # ---- pack masks + all folded weights/biases into ONE operand (1 DMA) ----
    masks = np.tile(_board_masks(H, W), (1, tile // HW))    # (9, tile)
    consts = jnp.zeros((c_rows, Wc), jnp.float32)
    consts = consts.at[0:9, 0:tile].set(jnp.asarray(masks))
    consts = consts.at[r_exp:r_exp + hidden, 0:Cin].set(w1_f)
    consts = consts.at[r_exp:r_exp + hidden, Cin].set(b1_f)
    consts = consts.at[r_exp:r_exp + hidden, Cin + 1:Cin + 10].set(wd_f)
    consts = consts.at[r_exp:r_exp + hidden, Cin + 10].set(b2_f)
    consts = consts.at[r_proj:r_proj + Cout, 0:hidden].set(w3_f)
    consts = consts.at[r_proj:r_proj + Cout, hidden].set(b3_f)

    # Channels on sublanes, all N*H*W pixels lane-dense on the lane axis.
    x_cp = jnp.transpose(x_nchw, (1, 0, 2, 3)).reshape(Cin, P).astype(jnp.float32)

    kernel = _make_kernel(Cin, hidden, Cout, tile, W, r_exp, r_proj, use_res)
    out_cp = pl.pallas_call(
        kernel,
        grid=(P // tile,),
        in_specs=[
            pl.BlockSpec((Cin, tile), lambda i: (0, i)),
            pl.BlockSpec((c_rows, Wc), lambda i: (0, 0)),   # constant block -> DMA'd once
        ],
        out_specs=pl.BlockSpec((Cout, tile), lambda i: (0, i)),
        out_shape=jax.ShapeDtypeStruct((Cout, P), jnp.float32),
        compiler_params=pltpu.CompilerParams(
            dimension_semantics=("parallel",)),             # both TensorCores on v7x
    )(x_cp, consts)

    return jnp.transpose(out_cp.reshape(Cout, N, H, W), (1, 0, 2, 3))


# ---------------- reference (pure JAX, NCHW, unfolded BN) ----------------
def ref_forward(x, p, hidden, use_res):
    def bn(h, g, be, m, v):
        return (h - m[None, :, None, None]) / jnp.sqrt(v[None, :, None, None] + EPS) \
            * g[None, :, None, None] + be[None, :, None, None]

    dn = ("NCHW", "OIHW", "NCHW")
    hp = lax.Precision.HIGHEST
    h = lax.conv_general_dilated(x, p["w1"], (1, 1), "VALID",
                                 dimension_numbers=dn, precision=hp)
    h = jnp.clip(bn(h, p["g1"], p["be1"], p["m1"], p["v1"]), 0.0, 6.0)
    h = lax.conv_general_dilated(h, p["wd"], (1, 1), ((1, 1), (1, 1)),
                                 dimension_numbers=dn, feature_group_count=hidden,
                                 precision=hp)
    h = jnp.clip(bn(h, p["g2"], p["be2"], p["m2"], p["v2"]), 0.0, 6.0)
    h = lax.conv_general_dilated(h, p["w3"], (1, 1), "VALID",
                                 dimension_numbers=dn, precision=hp)
    h = bn(h, p["g3"], p["be3"], p["m3"], p["v3"])
    return x + h if use_res else h


def make_params(key, Cin, Cout, hidden):
    ks = jax.random.split(key, 16)
    u = lambda k, s: jax.random.uniform(k, s, jnp.float32, 0.5, 1.5)
    n = lambda k, s, sc=0.1: sc * jax.random.normal(k, s, jnp.float32)
    return {
        "w1": n(ks[0], (hidden, Cin, 1, 1), 0.3),
        "g1": u(ks[1], (hidden,)), "be1": n(ks[2], (hidden,)),
        "m1": n(ks[3], (hidden,)), "v1": u(ks[4], (hidden,)),
        "wd": n(ks[5], (hidden, 1, 3, 3), 0.3),
        "g2": u(ks[6], (hidden,)), "be2": n(ks[7], (hidden,)),
        "m2": n(ks[8], (hidden,)), "v2": u(ks[9], (hidden,)),
        "w3": n(ks[10], (Cout, hidden, 1, 1), 0.3),
        "g3": u(ks[11], (Cout,)), "be3": n(ks[12], (Cout,)),
        "m3": n(ks[13], (Cout,)), "v3": u(ks[14], (Cout,)),
    }


if __name__ == "__main__":
    key = jax.random.PRNGKey(0)

    # Case 1: chess boards (8x8), residual path, P = 2*64 = 128 lanes, grid=(1,).
    # Case 2: batched boards, Cin != Cout (no residual), P = 16*64 = 1024 lanes,
    #         pixel tile = 512 -> grid=(2,), exercises the "parallel" grid axis.
    cases = [
        dict(N=2, Cin=4, Cout=4, H=8, W=8, expansion=4),
        dict(N=16, Cin=4, Cout=8, H=8, W=8, expansion=4),
    ]
    for i, c in enumerate(cases):
        key, kx, kp = jax.random.split(key, 3)
        hidden = c["Cin"] * c["expansion"]
        x = jax.random.normal(kx, (c["N"], c["Cin"], c["H"], c["W"]), jnp.float32)
        params = make_params(kp, c["Cin"], c["Cout"], hidden)

        out = mobile_inverted_bottleneck(x, params, expansion=c["expansion"], stride=1)
        out = jax.block_until_ready(out)

        use_res = c["Cin"] == c["Cout"]
        ref = jax.block_until_ready(ref_forward(x, params, hidden, use_res))
        assert out.shape == ref.shape
        err = float(jnp.max(jnp.abs(out - ref)))
        assert jnp.allclose(out, ref, rtol=5e-4, atol=5e-4), (i, err)

    print("KERNEL_OK")
</pallas_src>

<mosaic_0001>
module attributes {stable_mosaic.version = 11 : i64} {
  func.func @kernel(%arg0: i32, %arg1: memref<4x128xf32, #tpu.memory_space<vmem>>, %arg2: memref<40x128xf32, #tpu.memory_space<vmem>>, %arg3: memref<4x128xf32, #tpu.memory_space<vmem>>) attributes {dimension_semantics = [#tpu.dimension_semantics<parallel>], iteration_bounds = array<i64: 1>, scalar_prefetch = 0 : i64, scratch_operands = 0 : i64, tpu.core_type = #tpu.core_type<tc>, window_params = [{transform_indices = @transform_0, window_bounds = array<i64: 4, 128>}, {pipeline_mode = #tpu.pipeline_mode<synchronous>, transform_indices = @transform_1, window_bounds = array<i64: 40, 128>}, {transform_indices = @transform_2, window_bounds = array<i64: 4, 128>}]} {
    %c0 = arith.constant 0 : index
    %c0_0 = arith.constant 0 : index
    %0 = vector.load %arg1[%c0, %c0_0] : memref<4x128xf32, #tpu.memory_space<vmem>>, vector<4x128xf32>
    %c0_1 = arith.constant 0 : index
    %c0_2 = arith.constant 0 : index
    %1 = vector.load %arg2[%c0_1, %c0_2] : memref<40x128xf32, #tpu.memory_space<vmem>>, vector<9x128xf32>
    %c16 = arith.constant 16 : index
    %c0_3 = arith.constant 0 : index
    %2 = vector.load %arg2[%c16, %c0_3] : memref<40x128xf32, #tpu.memory_space<vmem>>, vector<16x128xf32>
    %c32 = arith.constant 32 : index
    %c0_4 = arith.constant 0 : index
    %3 = vector.load %arg2[%c32, %c0_4] : memref<40x128xf32, #tpu.memory_space<vmem>>, vector<4x128xf32>
    %4 = vector.extract_strided_slice %2 {offsets = [0, 0], sizes = [16, 4], strides = [1, 1]} : vector<16x128xf32> to vector<16x4xf32>
    %5 = vector.extract_strided_slice %2 {offsets = [0, 4], sizes = [16, 1], strides = [1, 1]} : vector<16x128xf32> to vector<16x1xf32>
    %6 = vector.extract_strided_slice %2 {offsets = [0, 5], sizes = [16, 9], strides = [1, 1]} : vector<16x128xf32> to vector<16x9xf32>
    %7 = vector.extract_strided_slice %2 {offsets = [0, 14], sizes = [16, 1], strides = [1, 1]} : vector<16x128xf32> to vector<16x1xf32>
    %8 = vector.extract_strided_slice %3 {offsets = [0, 0], sizes = [4, 16], strides = [1, 1]} : vector<4x128xf32> to vector<4x16xf32>
    %9 = vector.extract_strided_slice %3 {offsets = [0, 16], sizes = [4, 1], strides = [1, 1]} : vector<4x128xf32> to vector<4x1xf32>
    %cst = arith.constant dense<0.000000e+00> : vector<16x128xf32>
    %10 = tpu.matmul %4, %0, %cst {dimension_numbers = #tpu.dot_dimension_numbers<[1], [0], [0], [1], [0, 0, 1, 1], [], []>} : vector<16x4xf32>, vector<4x128xf32>, vector<16x128xf32> -> vector<16x128xf32>
    %11 = vector.broadcast %5 : vector<16x1xf32> to vector<16x128xf32>
    %12 = arith.addf %10, %11 : vector<16x128xf32>
    %cst_5 = arith.constant 0.000000e+00 : f32
    %cst_6 = arith.constant 6.000000e+00 : f32
    %13 = vector.broadcast %cst_5 : f32 to vector<16x128xf32>
    %14 = arith.maximumf %13, %12 : vector<16x128xf32>
    %15 = vector.broadcast %cst_6 : f32 to vector<16x128xf32>
    %16 = arith.minimumf %15, %14 : vector<16x128xf32>
    %c9_i32 = arith.constant 9 : i32
    %17 = tpu.dynamic_rotate %16 by %c9_i32 dim 1 : vector<16x128xf32>, i32 -> vector<16x128xf32>
    %18 = vector.extract_strided_slice %6 {offsets = [0, 0], sizes = [16, 1], strides = [1, 1]} : vector<16x9xf32> to vector<16x1xf32>
    %19 = vector.extract_strided_slice %1 {offsets = [0, 0], sizes = [1, 128], strides = [1, 1]} : vector<9x128xf32> to vector<1x128xf32>
    %20 = vector.broadcast %19 : vector<1x128xf32> to vector<16x128xf32>
    %21 = arith.mulf %17, %20 : vector<16x128xf32>
    %22 = vector.broadcast %18 : vector<16x1xf32> to vector<16x128xf32>
    %23 = arith.mulf %22, %21 : vector<16x128xf32>
    %24 = vector.broadcast %7 : vector<16x1xf32> to vector<16x128xf32>
    %25 = arith.addf %24, %23 : vector<16x128xf32>
    %c8_i32 = arith.constant 8 : i32
    %26 = tpu.dynamic_rotate %16 by %c8_i32 dim 1 : vector<16x128xf32>, i32 -> vector<16x128xf32>
    %27 = vector.extract_strided_slice %6 {offsets = [0, 1], sizes = [16, 1], strides = [1, 1]} : vector<16x9xf32> to vector<16x1xf32>
    %28 = vector.extract_strided_slice %1 {offsets = [1, 0], sizes = [1, 128], strides = [1, 1]} : vector<9x128xf32> to vector<1x128xf32>
    %29 = vector.broadcast %28 : vector<1x128xf32> to vector<16x128xf32>
    %30 = arith.mulf %26, %29 : vector<16x128xf32>
    %31 = vector.broadcast %27 : vector<16x1xf32> to vector<16x128xf32>
    %32 = arith.mulf %31, %30 : vector<16x128xf32>
    %33 = arith.addf %25, %32 : vector<16x128xf32>
    %c7_i32 = arith.constant 7 : i32
    %34 = tpu.dynamic_rotate %16 by %c7_i32 dim 1 : vector<16x128xf32>, i32 -> vector<16x128xf32>
    %35 = vector.extract_strided_slice %6 {offsets = [0, 2], sizes = [16, 1], strides = [1, 1]} : vector<16x9xf32> to vector<16x1xf32>
    %36 = vector.extract_strided_slice %1 {offsets = [2, 0], sizes = [1, 128], strides = [1, 1]} : vector<9x128xf32> to vector<1x128xf32>
    %37 = vector.broadcast %36 : vector<1x128xf32> to vector<16x128xf32>
    %38 = arith.mulf %34, %37 : vector<16x128xf32>
    %39 = vector.broadcast %35 : vector<16x1xf32> to vector<16x128xf32>
    %40 = arith.mulf %39, %38 : vector<16x128xf32>
    %41 = arith.addf %33, %40 : vector<16x128xf32>
    %c1_i32 = arith.constant 1 : i32
    %42 = tpu.dynamic_rotate %16 by %c1_i32 dim 1 : vector<16x128xf32>, i32 -> vector<16x128xf32>
    %43 = vector.extract_strided_slice %6 {offsets = [0, 3], sizes = [16, 1], strides = [1, 1]} : vector<16x9xf32> to vector<16x1xf32>
    %44 = vector.extract_strided_slice %1 {offsets = [3, 0], sizes = [1, 128], strides = [1, 1]} : vector<9x128xf32> to vector<1x128xf32>
    %45 = vector.broadcast %44 : vector<1x128xf32> to vector<16x128xf32>
    %46 = arith.mulf %42, %45 : vector<16x128xf32>
    %47 = vector.broadcast %43 : vector<16x1xf32> to vector<16x128xf32>
    %48 = arith.mulf %47, %46 : vector<16x128xf32>
    %49 = arith.addf %41, %48 : vector<16x128xf32>
    %50 = vector.extract_strided_slice %6 {offsets = [0, 4], sizes = [16, 1], strides = [1, 1]} : vector<16x9xf32> to vector<16x1xf32>
    %51 = vector.extract_strided_slice %1 {offsets = [4, 0], sizes = [1, 128], strides = [1, 1]} : vector<9x128xf32> to vector<1x128xf32>
    %52 = vector.broadcast %51 : vector<1x128xf32> to vector<16x128xf32>
    %53 = arith.mulf %16, %52 : vector<16x128xf32>
    %54 = vector.broadcast %50 : vector<16x1xf32> to vector<16x128xf32>
    %55 = arith.mulf %54, %53 : vector<16x128xf32>
    %56 = arith.addf %49, %55 : vector<16x128xf32>
    %c127_i32 = arith.constant 127 : i32
    %57 = tpu.dynamic_rotate %16 by %c127_i32 dim 1 : vector<16x128xf32>, i32 -> vector<16x128xf32>
    %58 = vector.extract_strided_slice %6 {offsets = [0, 5], sizes = [16, 1], strides = [1, 1]} : vector<16x9xf32> to vector<16x1xf32>
    %59 = vector.extract_strided_slice %1 {offsets = [5, 0], sizes = [1, 128], strides = [1, 1]} : vector<9x128xf32> to vector<1x128xf32>
    %60 = vector.broadcast %59 : vector<1x128xf32> to vector<16x128xf32>
    %61 = arith.mulf %57, %60 : vector<16x128xf32>
    %62 = vector.broadcast %58 : vector<16x1xf32> to vector<16x128xf32>
    %63 = arith.mulf %62, %61 : vector<16x128xf32>
    %64 = arith.addf %56, %63 : vector<16x128xf32>
    %c121_i32 = arith.constant 121 : i32
    %65 = tpu.dynamic_rotate %16 by %c121_i32 dim 1 : vector<16x128xf32>, i32 -> vector<16x128xf32>
    %66 = vector.extract_strided_slice %6 {offsets = [0, 6], sizes = [16, 1], strides = [1, 1]} : vector<16x9xf32> to vector<16x1xf32>
    %67 = vector.extract_strided_slice %1 {offsets = [6, 0], sizes = [1, 128], strides = [1, 1]} : vector<9x128xf32> to vector<1x128xf32>
    %68 = vector.broadcast %67 : vector<1x128xf32> to vector<16x128xf32>
    %69 = arith.mulf %65, %68 : vector<16x128xf32>
    %70 = vector.broadcast %66 : vector<16x1xf32> to vector<16x128xf32>
    %71 = arith.mulf %70, %69 : vector<16x128xf32>
    %72 = arith.addf %64, %71 : vector<16x128xf32>
    %c120_i32 = arith.constant 120 : i32
    %73 = tpu.dynamic_rotate %16 by %c120_i32 dim 1 : vector<16x128xf32>, i32 -> vector<16x128xf32>
    %74 = vector.extract_strided_slice %6 {offsets = [0, 7], sizes = [16, 1], strides = [1, 1]} : vector<16x9xf32> to vector<16x1xf32>
    %75 = vector.extract_strided_slice %1 {offsets = [7, 0], sizes = [1, 128], strides = [1, 1]} : vector<9x128xf32> to vector<1x128xf32>
    %76 = vector.broadcast %75 : vector<1x128xf32> to vector<16x128xf32>
    %77 = arith.mulf %73, %76 : vector<16x128xf32>
    %78 = vector.broadcast %74 : vector<16x1xf32> to vector<16x128xf32>
    %79 = arith.mulf %78, %77 : vector<16x128xf32>
    %80 = arith.addf %72, %79 : vector<16x128xf32>
    %c119_i32 = arith.constant 119 : i32
    %81 = tpu.dynamic_rotate %16 by %c119_i32 dim 1 : vector<16x128xf32>, i32 -> vector<16x128xf32>
    %82 = vector.extract_strided_slice %6 {offsets = [0, 8], sizes = [16, 1], strides = [1, 1]} : vector<16x9xf32> to vector<16x1xf32>
    %83 = vector.extract_strided_slice %1 {offsets = [8, 0], sizes = [1, 128], strides = [1, 1]} : vector<9x128xf32> to vector<1x128xf32>
    %84 = vector.broadcast %83 : vector<1x128xf32> to vector<16x128xf32>
    %85 = arith.mulf %81, %84 : vector<16x128xf32>
    %86 = vector.broadcast %82 : vector<16x1xf32> to vector<16x128xf32>
    %87 = arith.mulf %86, %85 : vector<16x128xf32>
    %88 = arith.addf %80, %87 : vector<16x128xf32>
    %cst_7 = arith.constant 0.000000e+00 : f32
    %cst_8 = arith.constant 6.000000e+00 : f32
    %89 = vector.broadcast %cst_7 : f32 to vector<16x128xf32>
    %90 = arith.maximumf %89, %88 : vector<16x128xf32>
    %91 = vector.broadcast %cst_8 : f32 to vector<16x128xf32>
    %92 = arith.minimumf %91, %90 : vector<16x128xf32>
    %cst_9 = arith.constant dense<0.000000e+00> : vector<4x128xf32>
    %93 = tpu.matmul %8, %92, %cst_9 {dimension_numbers = #tpu.dot_dimension_numbers<[1], [0], [0], [1], [0, 0, 1, 1], [], []>} : vector<4x16xf32>, vector<16x128xf32>, vector<4x128xf32> -> vector<4x128xf32>
    %94 = vector.broadcast %9 : vector<4x1xf32> to vector<4x128xf32>
    %95 = arith.addf %93, %94 : vector<4x128xf32>
    %96 = arith.addf %95, %0 : vector<4x128xf32>
    %c0_10 = arith.constant 0 : index
    %c0_11 = arith.constant 0 : index
    %97 = vector.load %arg3[%c0_10, %c0_11] : memref<4x128xf32, #tpu.memory_space<vmem>>, vector<4x128xf32>
    tpu.vector_store %arg3[%c0_10, %c0_11], %96 {strides = array<i32>} : memref<4x128xf32, #tpu.memory_space<vmem>>, vector<4x128xf32>,
    return
  }
  func.func @transform_0(%arg0: i32) -> (i32, i32) {
    %c0_i32 = arith.constant 0 : i32
    %c0_i32_0 = arith.constant 0 : i32
    return %c0_i32, %arg0 : i32, i32
  }
  func.func @transform_1(%arg0: i32) -> (i32, i32) {
    %c0_i32 = arith.constant 0 : i32
    %c0_i32_0 = arith.constant 0 : i32
    %c0_i32_1 = arith.constant 0 : i32
    return %c0_i32, %c0_i32_0 : i32, i32
  }
  func.func @transform_2(%arg0: i32) -> (i32, i32) {
    %c0_i32 = arith.constant 0 : i32
    %c0_i32_0 = arith.constant 0 : i32
    return %c0_i32, %arg0 : i32, i32
  }
}

</mosaic_0001>

<llo_original>
// kernel: squeeze.4
$region0: #{squeeze.4}
  %s0 = inlined_call_operand.vmem [shape: f32[16,3,3], index: 0, kind: input, shape index: {}]
  %s1 = inlined_call_operand.vmem [shape: f32[16,9], index: 1, kind: output, shape index: {}]
  $region1: #{squeeze.4} parent=0
    #allocation0 [shape = 'u8[12288]{0}', space=vmem, size = 0x3000, scoped, tag = 'scoped mem for input reshape']
    %s3 = sshllo.u32 0, 4
    %s4 = smul.addr 4, 2
    %s5 = scalar_lea.vmem %s0, %s4
    %v6 = vld [vmem:[%s5] sm:%s3]
    %s7 = scalar_lea.vmem [#allocation0], 16
    %8 = vst [vmem:[%s7] sm:%s3] %v6
    %s9 = scalar_lea.vmem %s0, 4
    %v10 = vld [vmem:[%s9] sm:%s3]
    %s11 = scalar_lea.vmem [#allocation0], 8
    %12 = vst [vmem:[%s11] sm:%s3] %v10
    %v13 = vld [vmem:[%s0] sm:%s3]
    %14 = vst [vmem:[#allocation0] sm:%s3] %v13
    %v15 = vld [vmem:[#allocation0] sm:$0x7]
    %vm16 = vcmask 130048
    %17 = vst.msk [vmem:[%s1] sm:$0x7] %vm16, %v15
    %s18 = scalar_lea.vmem [#allocation0], 8
    %v19 = vld [vmem:[%s18] sm:$0x7]
    %vm20 = vcmask 130048
    %s21 = scalar_lea.vmem %s1, 3
    %22 = vst.msk [vmem:[%s21] sm:$0x7] %vm20, %v19
    %s23 = scalar_lea.vmem [#allocation0], 16
    %v24 = vld [vmem:[%s23] sm:$0x7]
    %vm25 = vcmask 130048
    %s26 = scalar_lea.vmem %s1, 6
    %27 = vst.msk [vmem:[%s26] sm:$0x7] %vm25, %v24

// kernel: mobile_inverted_bottleneck.1
$region0: #{mobile_inverted_bottleneck.1}
  #allocation0 [shape = 'u32[]', space=smem, size = 0x4, offset = 0x4, fixed_abs, tag = 'smem constant byte address 0x4 - core index']
  #allocation1 [shape = 'u32[144,128]{1,0:T(1,128)}', space=vmem, size = 0x12000, scoped, tag = 'internal scratch']
  %s0 = inlined_call_operand.vmem [shape: f32[4,128], index: 0, kind: input, shape index: {}]
  %s1 = inlined_call_operand.vmem [shape: f32[40,128], index: 1, kind: input, shape index: {}]
  %s2 = inlined_call_operand.vmem [shape: f32[4,128], index: 2, kind: output, shape index: {}]
  %s3 = sld [smem:[#allocation0]]
  $region18: #{mobile_inverted_bottleneck.1} parent=0
    _
  %s5 = ssub.s32 1, %s3
  %s6 = scalar_select 0, %s5, %s3
  // Predicated region
  $region2: #{mobile_inverted_bottleneck.1} parent=0 // pred_check
    _
  $region3: #{mobile_inverted_bottleneck.1} parent=0 // pred_check_branch
    %8 = sbr.rel (0) target = $region5
  $region4: #{mobile_inverted_bottleneck.1} parent=0 // pred_region
    _
  $region5: #{mobile_inverted_bottleneck.1} parent=0 // pred_fallthru
    _
  // Predicated region
  $region6: #{mobile_inverted_bottleneck.1} parent=0 // pred_check
    _
  $region7: #{mobile_inverted_bottleneck.1} parent=0 // pred_check_branch
    %10 = sbr.rel (0) target = $region9
  $region8: #{mobile_inverted_bottleneck.1} parent=0 // pred_region
    _
  $region9: #{mobile_inverted_bottleneck.1} parent=0 // pred_fallthru
    _
  %v11 = vld [vmem:[%s0] sm:$0xf]
  %v12 = vld [vmem:[%s1] sm:$0xff]
  %v13 = vld [vmem:[%s1 + $0x8] sm:$0x1]
  %v14 = vld [vmem:[%s1 + $0x10] sm:$0xff]
  %v15 = vld [vmem:[%s1 + $0x18] sm:$0xff]
  %v16 = vld [vmem:[%s1 + $0x20] sm:$0xf]
  %18 = vset.pattern.permute.xlu0 4
  %19 = vperm.xlu0 %18, %v14
  %v20 = vpop.permute.xlu0 %19
  %23 = vset.pattern.permute.xlu0 4
  %24 = vperm.xlu0 %23, %v15
  %v25 = vpop.permute.xlu0 %24
  %vm27 = vcmask 31744
  %v28 = vsel %vm27, %v14, 0
  %v30 = vsel %vm27, %v15, 0
  %vm32 = vcmask 1043456
  %v34 = vsel %vm32, %v11, 0
  %36 = vmatprep.subr.mxu0 0.0
  %37 = vmatpush1.msra.mxu0 %v34
  %38 = vmatprep.subr.mxu0 0.0
  %39 = vmatpush1.msra.mxu0 0.0
  %40 = vmatprep.subr.mxu0 0.0
  %41 = vmatpush1.msra.mxu0 0.0
  %42 = vmatprep.subr.mxu0 0.0
  %43 = vmatpush1.msra.mxu0 0.0
  %44 = vmatprep.subr.mxu0 0.0
  %45 = vmatpush1.msra.mxu0 0.0
  %46 = vmatprep.subr.mxu0 0.0
  %47 = vmatpush1.msra.mxu0 0.0
  %48 = vmatprep.subr.mxu0 0.0
  %49 = vmatpush1.msra.mxu0 0.0
  %50 = vmatprep.subr.mxu0 0.0
  %51 = vmatpush1.msra.mxu0 0.0
  %52 = vmatprep.subr.mxu0 0.0
  %53 = vmatpush1.msra.mxu0 0.0
  %54 = vmatprep.subr.mxu0 0.0
  %55 = vmatpush1.msra.mxu0 0.0
  %56 = vmatprep.subr.mxu0 0.0
  %57 = vmatpush1.msra.mxu0 0.0
  %58 = vmatprep.subr.mxu0 0.0
  %59 = vmatpush1.msra.mxu0 0.0
  %60 = vmatprep.subr.mxu0 0.0
  %61 = vmatpush1.msra.mxu0 0.0
  %62 = vmatprep.subr.mxu0 0.0
  %63 = vmatpush1.msra.mxu0 0.0
  %64 = vmatprep.subr.mxu0 0.0
  %65 = vmatpush1.msra.mxu0 0.0
  %66 = vmatprep.subr.mxu0 0.0
  %67 = vmatpush1.msra.mxu0 0.0
  %68 = vmatprep.subr.mxu0 0.0
  %69 = vmatpush1.msra.mxu0 0.0
  %70 = vmatprep.subr.mxu0 0.0
  %71 = vmatpush1.msra.mxu0 0.0
  %72 = vmatprep.subr.mxu0 0.0
  %73 = vmatpush1.msra.mxu0 0.0
  %74 = vmatprep.subr.mxu0 0.0
  %75 = vmatpush1.msra.mxu0 0.0
  %76 = vmatprep.subr.mxu0 0.0
  %77 = vmatpush1.msra.mxu0 0.0
  %78 = vmatprep.subr.mxu0 0.0
  %79 = vmatpush1.msra.mxu0 0.0
  %80 = vmatprep.subr.mxu0 0.0
  %81 = vmatpush1.msra.mxu0 0.0
  %82 = vmatprep.subr.mxu0 0.0
  %83 = vmatpush1.msra.mxu0 0.0
  %84 = vmatprep.subr.mxu0 0.0
  %85 = vmatpush1.msra.mxu0 0.0
  %86 = vmatprep.subr.mxu0 0.0
  %87 = vmatpush1.msra.mxu0 0.0
  %88 = vmatprep.subr.mxu0 0.0
  %89 = vmatpush1.msra.mxu0 0.0
  %90 = vmatprep.subr.mxu0 0.0
  %91 = vmatpush1.msra.mxu0 0.0
  %92 = vmatprep.subr.mxu0 0.0
  %93 = vmatpush1.msra.mxu0 0.0
  %94 = vmatprep.subr.mxu0 0.0
  %95 = vmatpush1.msra.mxu0 0.0
  %96 = vmatprep.subr.mxu0 0.0
  %97 = vmatpush1.msra.mxu0 0.0
  %98 = vmatprep.subr.mxu0 0.0
  %99 = vmatpush1.msra.mxu0 0.0
  %100 = vmatprep.mubr.f32.mxu0 0.0
  %101 = vmatmul.mubr.f32.gmra.mrb[0].mxu0 %v28
  %v102 = vpop.f32.mrb[0].mxu0
  %v103 = vadd.f32 %v20, %v102
  %v104 = vpop.f32.mrb[0].mxu0
  %105 = vmatprep.mubr.f32.mxu0 0.0
  %106 = vmatmul.mubr.f32.gmra.mrb[0].mxu0 %v30
  %v107 = vpop.f32.mrb[0].mxu0
  %v108 = vadd.f32 %v25, %v107
  %v109 = vpop.f32.mrb[0].mxu0
  %110 = vdwg.mxu0
  %v111 = vmax.f32 %v103, 0.0
  %v112 = vmax.f32 %v108, 0.0
  %v113 = vmin.f32 %v111, 6.0
  %v114 = vmin.f32 %v112, 6.0
  %115 = vrot.lane.b32.xlu0 %v113, 9
  %v116 = vpop.permute.xlu0 %115
  %117 = vrot.lane.b32.xlu0 %v114, 9
  %v118 = vpop.permute.xlu0 %117
  %v119 = vlaneseq
  %v120 = vshrl.u32 %v119, 7
  %v121 = vsub.s32 0, %v120
  %v122 = vrot.slane %v12, %v121
  %v123 = vmul.f32 %v116, %v122
  %v124 = vmul.f32 %v118, %v122
  %125 = vset.pattern.permute.xlu0 5
  %126 = vperm.xlu0 %125, %v14
  %v127 = vpop.permute.xlu0 %126
  %129 = vset.pattern.permute.xlu0 5
  %130 = vperm.xlu0 %129, %v15
  %v131 = vpop.permute.xlu0 %130
  %v133 = vmul.f32 %v127, %v123
  %v134 = vmul.f32 %v131, %v124
  %135 = vset.pattern.permute.xlu0 14
  %136 = vperm.xlu0 %135, %v14
  %v137 = vpop.permute.xlu0 %136
  %139 = vset.pattern.permute.xlu0 14
  %140 = vperm.xlu0 %139, %v15
  %v141 = vpop.permute.xlu0 %140
  %v143 = vadd.f32 %v137, %v133
  %v144 = vadd.f32 %v141, %v134
  %145 = vrot.lane.b32.xlu0 %v113, 8
  %v146 = vpop.permute.xlu0 %145
  %147 = vrot.lane.b32.xlu0 %v114, 8
  %v148 = vpop.permute.xlu0 %147
  %v149 = vlaneseq
  %v150 = vshrl.u32 %v149, 7
  %v151 = vsub.s32 1, %v150
  %v152 = vrot.slane %v12, %v151
  %v153 = vmul.f32 %v146, %v152
  %v154 = vmul.f32 %v148, %v152
  %155 = vset.pattern.permute.xlu0 6
  %156 = vperm.xlu0 %155, %v14
  %v157 = vpop.permute.xlu0 %156
  %159 = vset.pattern.permute.xlu0 6
  %160 = vperm.xlu0 %159, %v15
  %v161 = vpop.permute.xlu0 %160
  %v163 = vmul.f32 %v157, %v153
  %v164 = vmul.f32 %v161, %v154
  %v165 = vadd.f32 %v143, %v163
  %v166 = vadd.f32 %v144, %v164
  %167 = vrot.lane.b32.xlu0 %v113, 7
  %v168 = vpop.permute.xlu0 %167
  %169 = vrot.lane.b32.xlu0 %v114, 7
  %v170 = vpop.permute.xlu0 %169
  %v171 = vlaneseq
  %v172 = vshrl.u32 %v171, 7
  %v173 = vsub.s32 2, %v172
  %v174 = vrot.slane %v12, %v173
  %v175 = vmul.f32 %v168, %v174
  %v176 = vmul.f32 %v170, %v174
  %177 = vset.pattern.permute.xlu0 7
  %178 = vperm.xlu0 %177, %v14
  %v179 = vpop.permute.xlu0 %178
  %181 = vset.pattern.permute.xlu0 7
  %182 = vperm.xlu0 %181, %v15
  %v183 = vpop.permute.xlu0 %182
  %v185 = vmul.f32 %v179, %v175
  %v186 = vmul.f32 %v183, %v176
  %v187 = vadd.f32 %v165, %v185
  %v188 = vadd.f32 %v166, %v186
  %189 = vrot.lane.b32.xlu0 %v113, 1
  %v190 = vpop.permute.xlu0 %189
  %191 = vrot.lane.b32.xlu0 %v114, 1
  %v192 = vpop.permute.xlu0 %191
  %v193 = vlaneseq
  %v194 = vshrl.u32 %v193, 7
  %v195 = vsub.s32 3, %v194
  %v196 = vrot.slane %v12, %v195
  %v197 = vmul.f32 %v190, %v196
  %v198 = vmul.f32 %v192, %v196
  %199 = vset.pattern.permute.xlu0 8
  %200 = vperm.xlu0 %199, %v14
  %v201 = vpop.permute.xlu0 %200
  %203 = vset.pattern.permute.xlu0 8
  %204 = vperm.xlu0 %203, %v15
  %v205 = vpop.permute.xlu0 %204
  %v207 = vmul.f32 %v201, %v197
  %v208 = vmul.f32 %v205, %v198
  %v209 = vadd.f32 %v187, %v207
  %v210 = vadd.f32 %v188, %v208
  %v211 = vlaneseq
  %v212 = vshrl.u32 %v211, 7
  %v213 = vsub.s32 4, %v212
  %v214 = vrot.slane %v12, %v213
  %v215 = vmul.f32 %v113, %v214
  %v216 = vmul.f32 %v114, %v214
  %217 = vset.pattern.permute.xlu0 9
  %218 = vperm.xlu0 %217, %v14
  %v219 = vpop.permute.xlu0 %218
  %221 = vset.pattern.permute.xlu0 9
  %222 = vperm.xlu0 %221, %v15
  %v223 = vpop.permute.xlu0 %222
  %v225 = vmul.f32 %v219, %v215
  %v226 = vmul.f32 %v223, %v216
  %v227 = vadd.f32 %v209, %v225
  %v228 = vadd.f32 %v210, %v226
  %229 = vrot.lane.b32.xlu0 %v113, 127
  %v230 = vpop.permute.xlu0 %229
  %231 = vrot.lane.b32.xlu0 %v114, 127
  %v232 = vpop.permute.xlu0 %231
  %v233 = vlaneseq
  %v234 = vshrl.u32 %v233, 7
  %v235 = vsub.s32 5, %v234
  %v236 = vrot.slane %v12, %v235
  %v237 = vmul.f32 %v230, %v236
  %v238 = vmul.f32 %v232, %v236
  %239 = vset.pattern.permute.xlu0 10
  %240 = vperm.xlu0 %239, %v14
  %v241 = vpop.permute.xlu0 %240
  %243 = vset.pattern.permute.xlu0 10
  %244 = vperm.xlu0 %243, %v15
  %v245 = vpop.permute.xlu0 %244
  %v247 = vmul.f32 %v241, %v237
  %v248 = vmul.f32 %v245, %v238
  %v249 = vadd.f32 %v227, %v247
  %v250 = vadd.f32 %v228, %v248
  %251 = vrot.lane.b32.xlu0 %v113, 121
  %v252 = vpop.permute.xlu0 %251
  %253 = vrot.lane.b32.xlu0 %v114, 121
  %v254 = vpop.permute.xlu0 %253
  %v255 = vlaneseq
  %v256 = vshrl.u32 %v255, 7
  %v257 = vsub.s32 6, %v256
  %v258 = vrot.slane %v12, %v257
  %v259 = vmul.f32 %v252, %v258
  %v260 = vmul.f32 %v254, %v258
  %261 = vset.pattern.permute.xlu0 11
  %262 = vperm.xlu0 %261, %v14
  %v263 = vpop.permute.xlu0 %262
  %265 = vset.pattern.permute.xlu0 11
  %266 = vperm.xlu0 %265, %v15
  %v267 = vpop.permute.xlu0 %266
  %v269 = vmul.f32 %v263, %v259
  %v270 = vmul.f32 %v267, %v260
  %v271 = vadd.f32 %v249, %v269
  %v272 = vadd.f32 %v250, %v270
  %273 = vrot.lane.b32.xlu0 %v113, 120
  %v274 = vpop.permute.xlu0 %273
  %275 = vrot.lane.b32.xlu0 %v114, 120
  %v276 = vpop.permute.xlu0 %275
  %v277 = vlaneseq
  %v278 = vshrl.u32 %v277, 7
  %v279 = vsub.s32 7, %v278
  %v280 = vrot.slane %v12, %v279
  %v281 = vmul.f32 %v274, %v280
  %v282 = vmul.f32 %v276, %v280
  %283 = vset.pattern.permute.xlu0 12
  %284 = vperm.xlu0 %283, %v14
  %v285 = vpop.permute.xlu0 %284
  %287 = vset.pattern.permute.xlu0 12
  %288 = vperm.xlu0 %287, %v15
  %v289 = vpop.permute.xlu0 %288
  %v291 = vmul.f32 %v285, %v281
  %v292 = vmul.f32 %v289, %v282
  %v293 = vadd.f32 %v271, %v291
  %v294 = vadd.f32 %v272, %v292
  %295 = vrot.lane.b32.xlu0 %v113, 119
  %v296 = vpop.permute.xlu0 %295
  %297 = vrot.lane.b32.xlu0 %v114, 119
  %v298 = vpop.permute.xlu0 %297
  %v299 = vlaneseq
  %v300 = vshrl.u32 %v299, 7
  %v301 = vsub.s32 0, %v300
  %v302 = vrot.slane %v13, %v301
  %v303 = vmul.f32 %v296, %v302
  %v304 = vmul.f32 %v298, %v302
  %305 = vset.pattern.permute.xlu0 13
  %306 = vperm.xlu0 %305, %v14
  %v307 = vpop.permute.xlu0 %306
  %309 = vset.pattern.permute.xlu0 13
  %310 = vperm.xlu0 %309, %v15
  %v311 = vpop.permute.xlu0 %310
  %v313 = vmul.f32 %v307, %v303
  %v314 = vmul.f32 %v311, %v304
  %v315 = vadd.f32 %v293, %v313
  %v316 = vadd.f32 %v294, %v314
  %v317 = vmax.f32 %v315, 0.0
  %v318 = vmax.f32 %v316, 0.0
  %v319 = vmin.f32 %v317, 6.0
  %v320 = vmin.f32 %v318, 6.0
  %322 = vset.pattern.permute.xlu0 16
  %323 = vperm.xlu0 %322, %v16
  %v324 = vpop.permute.xlu0 %323
  %vm326 = vcmask 130048
  %v327 = vsel %vm326, %v16, 0
  %329 = vmatprep.subr.mxu0 0.0
  %330 = vmatpush1.msra.mxu0 %v319
  %331 = vmatprep.subr.mxu0 0.0
  %332 = vmatpush1.msra.mxu0 %v320
  %333 = vmatprep.subr.mxu0 0.0
  %334 = vmatpush1.msra.mxu0 0.0
  %335 = vmatprep.subr.mxu0 0.0
  %336 = vmatpush1.msra.mxu0 0.0
  %337 = vmatprep.subr.mxu0 0.0
  %338 = vmatpush1.msra.mxu0 0.0
  %339 = vmatprep.subr.mxu0 0.0
  %340 = vmatpush1.msra.mxu0 0.0
  %341 = vmatprep.subr.mxu0 0.0
  %342 = vmatpush1.msra.mxu0 0.0
  %343 = vmatprep.subr.mxu0 0.0
  %344 = vmatpush1.msra.mxu0 0.0
  %345 = vmatprep.subr.mxu0 0.0
  %346 = vmatpush1.msra.mxu0 0.0
  %347 = vmatprep.subr.mxu0 0.0
  %348 = vmatpush1.msra.mxu0 0.0
  %349 = vmatprep.subr.mxu0 0.0
  %350 = vmatpush1.msra.mxu0 0.0
  %351 = vmatprep.subr.mxu0 0.0
  %352 = vmatpush1.msra.mxu0 0.0
  %353 = vmatprep.subr.mxu0 0.0
  %354 = vmatpush1.msra.mxu0 0.0
  %355 = vmatprep.subr.mxu0 0.0
  %356 = vmatpush1.msra.mxu0 0.0
  %357 = vmatprep.subr.mxu0 0.0
  %358 = vmatpush1.msra.mxu0 0.0
  %359 = vmatprep.subr.mxu0 0.0
  %360 = vmatpush1.msra.mxu0 0.0
  %361 = vmatprep.subr.mxu0 0.0
  %362 = vmatpush1.msra.mxu0 0.0
  %363 = vmatprep.subr.mxu0 0.0
  %364 = vmatpush1.msra.mxu0 0.0
  %365 = vmatprep.subr.mxu0 0.0
  %366 = vmatpush1.msra.mxu0 0.0
  %367 = vmatprep.subr.mxu0 0.0
  %368 = vmatpush1.msra.mxu0 0.0
  %369 = vmatprep.subr.mxu0 0.0
  %370 = vmatpush1.msra.mxu0 0.0
  %371 = vmatprep.subr.mxu0 0.0
  %372 = vmatpush1.msra.mxu0 0.0
  %373 = vmatprep.subr.mxu0 0.0
  %374 = vmatpush1.msra.mxu0 0.0
  %375 = vmatprep.subr.mxu0 0.0
  %376 = vmatpush1.msra.mxu0 0.0
  %377 = vmatprep.subr.mxu0 0.0
  %378 = vmatpush1.msra.mxu0 0.0
  %379 = vmatprep.subr.mxu0 0.0
  %380 = vmatpush1.msra.mxu0 0.0
  %381 = vmatprep.subr.mxu0 0.0
  %382 = vmatpush1.msra.mxu0 0.0
  %383 = vmatprep.subr.mxu0 0.0
  %384 = vmatpush1.msra.mxu0 0.0
  %385 = vmatprep.subr.mxu0 0.0
  %386 = vmatpush1.msra.mxu0 0.0
  %387 = vmatprep.subr.mxu0 0.0
  %388 = vmatpush1.msra.mxu0 0.0
  %389 = vmatprep.subr.mxu0 0.0
  %390 = vmatpush1.msra.mxu0 0.0
  %391 = vmatprep.subr.mxu0 0.0
  %392 = vmatpush1.msra.mxu0 0.0
  %393 = vmatprep.mubr.f32.mxu0 0.0
  %394 = vmatmul.mubr.f32.gmra.mrb[0].mxu0 %v327
  %v395 = vpop.f32.mrb[0].mxu0
  %v396 = vadd.f32 %v324, %v395
  %v397 = vpop.f32.mrb[0].mxu0
  %398 = vdwg.mxu0
  %v399 = vadd.f32 %v396, %v11
  %400 = vst [vmem:[%s2] sm:$0xf] %v399
  // Predicated region
  $region10: #{mobile_inverted_bottleneck.1} parent=0 // pred_check
    _
  $region11: #{mobile_inverted_bottleneck.1} parent=0 // pred_check_branch
    %402 = sbr.rel (0) target = $region13
  $region12: #{mobile_inverted_bottleneck.1} parent=0 // pred_region
    _
  $region13: #{mobile_inverted_bottleneck.1} parent=0 // pred_fallthru
    _
  // Predicated region
  $region14: #{mobile_inverted_bottleneck.1} parent=0 // pred_check
    _
  $region15: #{mobile_inverted_bottleneck.1} parent=0 // pred_check_branch
    %404 = sbr.rel (0) target = $region17
  $region16: #{mobile_inverted_bottleneck.1} parent=0 // pred_region
    _
  $region17: #{mobile_inverted_bottleneck.1} parent=0 // pred_fallthru
    _

</llo_original>
